<compile_context>
chip_gen: v5e
topology: v5e:2x2
jax: 0.10.0
libtpu: 0.0.40
codegen_flags: <defaults>
</compile_context>

<pallas_src>
import jax
import jax.numpy as jnp
from jax.experimental import pallas as pl
from jax.experimental.pallas import tpu as pltpu


# ---------------------------------------------------------------------------
# Kernels
# ---------------------------------------------------------------------------

def _mlp_q(x_ref, w1_ref, b1_ref, w2_ref, b2_ref, w3_ref, b3_ref):
    """Fused 3-layer MLP.  Returns f32 Q-values of shape (rows, n_actions)."""
    # Layer 1: Linear + ReLU (MXU matmul, f32 accumulate; VPU bias add + max)
    h = jnp.dot(x_ref[...], w1_ref[...], preferred_element_type=jnp.float32)
    h = jnp.maximum(h + b1_ref[...].astype(jnp.float32), 0.0)
    # Layer 2: Linear + ReLU
    h = jnp.dot(h.astype(w2_ref.dtype), w2_ref[...],
                preferred_element_type=jnp.float32)
    h = jnp.maximum(h + b2_ref[...].astype(jnp.float32), 0.0)
    # Layer 3: Linear (no activation)
    q = jnp.dot(h.astype(w3_ref.dtype), w3_ref[...],
                preferred_element_type=jnp.float32)
    return q + b3_ref[...].astype(jnp.float32)


def dqln_kernel(x_ref, w1_ref, b1_ref, w2_ref, b2_ref, w3_ref, b3_ref, o_ref):
    q = _mlp_q(x_ref, w1_ref, b1_ref, w2_ref, b2_ref, w3_ref, b3_ref)
    o_ref[...] = q.astype(o_ref.dtype)   # cast only at the final store


def dqln_argmax_kernel(x_ref, w1_ref, b1_ref, w2_ref, b2_ref, w3_ref, b3_ref,
                       a_ref):
    """Action-selection fast path: fused MLP + argmax over actions."""
    q = _mlp_q(x_ref, w1_ref, b1_ref, w2_ref, b2_ref, w3_ref, b3_ref)
    n_act = q.shape[-1]
    idx = jax.lax.broadcasted_iota(jnp.int32, q.shape, 1)
    m = jnp.max(q, axis=-1, keepdims=True)
    # First index attaining the max (matches torch/jnp argmax tie-breaking).
    a_ref[...] = jnp.min(jnp.where(q == m, idx, n_act), axis=-1, keepdims=True)


# ---------------------------------------------------------------------------
# Wrappers
# ---------------------------------------------------------------------------

_VMEM_SPEC = pl.BlockSpec(memory_space=pltpu.MemorySpace.VMEM)


def dqln_forward(x, params, *, batch_tile=4096):
    """DQLN forward pass via Pallas.

    Small batches (B <= batch_tile) run as a single ungridded invocation with
    every operand resident in VMEM.  Larger (replay) batches are tiled over
    the batch axis with large tiles and an EVEN tile count so the "parallel"
    axis splits evenly across v7x's two TensorCores; weights/biases use a
    constant index_map and stay resident in VMEM across grid steps.  The
    output keeps its true n_actions width (no lane padding, no slice copy).
    """
    w1, b1, w2, b2, w3, b3 = params
    B, n_obs = x.shape
    h0 = w1.shape[1]
    h1 = w2.shape[1]
    n_actions = w3.shape[1]

    if B <= batch_tile:
        # Single invocation: no grid, no pipelining machinery.  Explicit
        # full-array VMEM specs guarantee one DMA per operand + one store.
        return pl.pallas_call(
            dqln_kernel,
            out_shape=jax.ShapeDtypeStruct((B, n_actions), x.dtype),
            in_specs=[_VMEM_SPEC] * 7,
            out_specs=_VMEM_SPEC,
        )(x, w1, b1, w2, b2, w3, b3)

    # ---- Gridded replay path -------------------------------------------
    num_tiles = pl.cdiv(B, batch_tile)
    if num_tiles % 2:
        num_tiles += 1            # even tile count -> balanced on v7x's 2 TCs
    tile = ((pl.cdiv(B, num_tiles) + 7) // 8) * 8   # rows: multiple of 8
    Bp = tile * num_tiles
    xp = x if Bp == B else jnp.pad(x, ((0, Bp - B), (0, 0)))

    # Grid-invariant weights/biases: constant index_map keeps them resident.
    def full(shape):
        return pl.BlockSpec(shape, lambda i: (0, 0))

    out = pl.pallas_call(
        dqln_kernel,
        out_shape=jax.ShapeDtypeStruct((Bp, n_actions), x.dtype),
        grid_spec=pltpu.PrefetchScalarGridSpec(
            num_scalar_prefetch=0,
            grid=(num_tiles,),
            in_specs=[
                pl.BlockSpec((tile, n_obs), lambda i: (i, 0)),   # x tile
                full((n_obs, h0)), full((1, h0)),
                full((h0, h1)), full((1, h1)),
                full((h1, n_actions)), full((1, n_actions)),
            ],
            out_specs=pl.BlockSpec((tile, n_actions), lambda i: (i, 0)),
        ),
        compiler_params=pltpu.CompilerParams(
            dimension_semantics=("parallel",)),
    )(xp, w1, b1, w2, b2, w3, b3)
    return out if Bp == B else out[:B]


def dqln_select_action(x, params):
    """DQN act() fast path: fused forward + argmax, returns (B,) int32."""
    w1, b1, w2, b2, w3, b3 = params
    B = x.shape[0]
    a = pl.pallas_call(
        dqln_argmax_kernel,
        out_shape=jax.ShapeDtypeStruct((B, 1), jnp.int32),
        in_specs=[_VMEM_SPEC] * 7,
        out_specs=_VMEM_SPEC,
    )(x, w1, b1, w2, b2, w3, b3)
    return a[:, 0]


def init_dqln_params(key, n_observations, n_actions, hidden_sizes,
                     dtype=jnp.float32):
    """Deterministic PyTorch-style (uniform +/- 1/sqrt(fan_in)) init.

    Weights are produced directly in (in_features, out_features) layout.
    dtype=jnp.bfloat16 is the native MXU dtype on v6e/v7x (and safe on v5e):
    the kernel still accumulates and does all elementwise math in f32.
    """
    dims = [n_observations, hidden_sizes[0], hidden_sizes[1], n_actions]
    params = []
    for li in range(3):
        fan_in, fan_out = dims[li], dims[li + 1]
        key, kw, kb = jax.random.split(key, 3)
        bound = 1.0 / (fan_in ** 0.5)
        w = jax.random.uniform(kw, (fan_in, fan_out), dtype,
                               minval=-bound, maxval=bound)
        b = jax.random.uniform(kb, (1, fan_out), dtype,
                               minval=-bound, maxval=bound)
        params.extend([w, b])
    return tuple(params)


def dqln_reference(x, params):
    """Plain-JAX reference for correctness checking."""
    w1, b1, w2, b2, w3, b3 = params
    f32 = jnp.float32
    h = jnp.maximum(x.astype(f32) @ w1.astype(f32) + b1.astype(f32), 0.0)
    h = jnp.maximum(h @ w2.astype(f32) + b2.astype(f32), 0.0)
    return (h @ w3.astype(f32) + b3.astype(f32)).astype(x.dtype)


if __name__ == "__main__":
    # Small shapes consistent with a DQN on a low-dim observation space.
    batch = 16
    n_observations = 8
    hidden_sizes = (32, 64)
    n_actions = 4

    key = jax.random.PRNGKey(0)
    key, kx = jax.random.split(key)
    x = jax.random.normal(kx, (batch, n_observations), dtype=jnp.float32)
    params = init_dqln_params(key, n_observations, n_actions, hidden_sizes)

    # Small batch -> single ungridded invocation path.
    out = jax.block_until_ready(dqln_forward(x, params))
    ref = dqln_reference(x, params)
    assert out.shape == (batch, n_actions)
    assert jnp.allclose(out, ref, atol=1e-5, rtol=1e-5), "mismatch vs reference"

    # Action-selection fast path (fused forward + argmax).
    act = jax.block_until_ready(dqln_select_action(x, params))
    assert act.shape == (batch,)
    assert jnp.array_equal(act.astype(jnp.int32),
                           jnp.argmax(out, axis=-1).astype(jnp.int32)), \
        "argmax fast path mismatch"

    # Gridded replay path: uneven batch, small tile to force multiple (even)
    # grid steps at test scale.
    big_B = 2048 + 37
    key, kb = jax.random.split(key)
    xb = jax.random.normal(kb, (big_B, n_observations), dtype=jnp.float32)
    out_b = jax.block_until_ready(dqln_forward(xb, params, batch_tile=512))
    ref_b = dqln_reference(xb, params)
    assert out_b.shape == (big_B, n_actions)
    assert jnp.allclose(out_b, ref_b, atol=1e-5, rtol=1e-5), "tiled mismatch"

    # bf16 weights/activations (native MXU path on v6e/v7x; safe on v5e).
    params_bf = init_dqln_params(jax.random.PRNGKey(1), n_observations,
                                 n_actions, hidden_sizes, dtype=jnp.bfloat16)
    x_bf = x.astype(jnp.bfloat16)
    out_bf = jax.block_until_ready(dqln_forward(x_bf, params_bf))
    ref_bf = dqln_reference(x_bf, params_bf)
    assert out_bf.shape == (batch, n_actions)
    assert jnp.allclose(out_bf.astype(jnp.float32), ref_bf.astype(jnp.float32),
                        atol=1e-1, rtol=1e-1), "bf16 mismatch"

    print("KERNEL_OK")
</pallas_src>

<mosaic_0001>
module attributes {stable_mosaic.version = 11 : i64} {
  func.func @dqln_kernel(%arg0: memref<16x8xf32, #tpu.memory_space<vmem>>, %arg1: memref<8x32xf32, #tpu.memory_space<vmem>>, %arg2: memref<1x32xf32, #tpu.memory_space<vmem>>, %arg3: memref<32x64xf32, #tpu.memory_space<vmem>>, %arg4: memref<1x64xf32, #tpu.memory_space<vmem>>, %arg5: memref<64x4xf32, #tpu.memory_space<vmem>>, %arg6: memref<1x4xf32, #tpu.memory_space<vmem>>, %arg7: memref<16x4xf32, #tpu.memory_space<vmem>>) attributes {dimension_semantics = [], scalar_prefetch = 0 : i64, scratch_operands = 0 : i64, tpu.core_type = #tpu.core_type<tc>} {
    %c0 = arith.constant 0 : index
    %c0_0 = arith.constant 0 : index
    %0 = vector.load %arg0[%c0, %c0_0] : memref<16x8xf32, #tpu.memory_space<vmem>>, vector<16x8xf32>
    %c0_1 = arith.constant 0 : index
    %c0_2 = arith.constant 0 : index
    %1 = vector.load %arg1[%c0_1, %c0_2] : memref<8x32xf32, #tpu.memory_space<vmem>>, vector<8x32xf32>
    %cst = arith.constant dense<0.000000e+00> : vector<16x32xf32>
    %2 = tpu.matmul %0, %1, %cst {dimension_numbers = #tpu.dot_dimension_numbers<[1], [0], [0], [1], [0, 0, 1, 1], [], []>} : vector<16x8xf32>, vector<8x32xf32>, vector<16x32xf32> -> vector<16x32xf32>
    %c0_3 = arith.constant 0 : index
    %c0_4 = arith.constant 0 : index
    %3 = vector.load %arg2[%c0_3, %c0_4] : memref<1x32xf32, #tpu.memory_space<vmem>>, vector<1x32xf32>
    %4 = vector.broadcast %3 : vector<1x32xf32> to vector<16x32xf32>
    %5 = arith.addf %2, %4 : vector<16x32xf32>
    %cst_5 = arith.constant 0.000000e+00 : f32
    %6 = vector.broadcast %cst_5 : f32 to vector<16x32xf32>
    %7 = arith.maximumf %5, %6 : vector<16x32xf32>
    %c0_6 = arith.constant 0 : index
    %c0_7 = arith.constant 0 : index
    %8 = vector.load %arg3[%c0_6, %c0_7] : memref<32x64xf32, #tpu.memory_space<vmem>>, vector<32x64xf32>
    %cst_8 = arith.constant dense<0.000000e+00> : vector<16x64xf32>
    %9 = tpu.matmul %7, %8, %cst_8 {dimension_numbers = #tpu.dot_dimension_numbers<[1], [0], [0], [1], [0, 0, 1, 1], [], []>} : vector<16x32xf32>, vector<32x64xf32>, vector<16x64xf32> -> vector<16x64xf32>
    %c0_9 = arith.constant 0 : index
    %c0_10 = arith.constant 0 : index
    %10 = vector.load %arg4[%c0_9, %c0_10] : memref<1x64xf32, #tpu.memory_space<vmem>>, vector<1x64xf32>
    %11 = vector.broadcast %10 : vector<1x64xf32> to vector<16x64xf32>
    %12 = arith.addf %9, %11 : vector<16x64xf32>
    %cst_11 = arith.constant 0.000000e+00 : f32
    %13 = vector.broadcast %cst_11 : f32 to vector<16x64xf32>
    %14 = arith.maximumf %12, %13 : vector<16x64xf32>
    %c0_12 = arith.constant 0 : index
    %c0_13 = arith.constant 0 : index
    %15 = vector.load %arg5[%c0_12, %c0_13] : memref<64x4xf32, #tpu.memory_space<vmem>>, vector<64x4xf32>
    %cst_14 = arith.constant dense<0.000000e+00> : vector<16x4xf32>
    %16 = tpu.matmul %14, %15, %cst_14 {dimension_numbers = #tpu.dot_dimension_numbers<[1], [0], [0], [1], [0, 0, 1, 1], [], []>} : vector<16x64xf32>, vector<64x4xf32>, vector<16x4xf32> -> vector<16x4xf32>
    %c0_15 = arith.constant 0 : index
    %c0_16 = arith.constant 0 : index
    %17 = vector.load %arg6[%c0_15, %c0_16] : memref<1x4xf32, #tpu.memory_space<vmem>>, vector<1x4xf32>
    %18 = vector.broadcast %17 : vector<1x4xf32> to vector<16x4xf32>
    %19 = arith.addf %16, %18 : vector<16x4xf32>
    %c0_17 = arith.constant 0 : index
    %c0_18 = arith.constant 0 : index
    %20 = vector.load %arg7[%c0_17, %c0_18] : memref<16x4xf32, #tpu.memory_space<vmem>>, vector<16x4xf32>
    tpu.vector_store %arg7[%c0_17, %c0_18], %19 {strides = array<i32>} : memref<16x4xf32, #tpu.memory_space<vmem>>, vector<16x4xf32>,
    return
  }
}

</mosaic_0001>

<llo_original>
// kernel: tpu_custom_call.1
$region0: #{tpu_custom_call.1}
  #allocation0 [shape = 'u32[]', space=smem, size = 0x4, offset = 0x4, fixed_abs, tag = 'smem constant byte address 0x4 - core index']
  #allocation1 [shape = 'u32[72,128]{1,0:T(1,128)}', space=vmem, size = 0x9000, scoped, tag = 'internal scratch']
  %s0 = inlined_call_operand.vmem [shape: f32[16,8], index: 0, kind: input, shape index: {}]
  %s1 = inlined_call_operand.vmem [shape: f32[8,32], index: 1, kind: input, shape index: {}]
  %s2 = inlined_call_operand.vmem [shape: f32[1,32], index: 2, kind: input, shape index: {}]
  %s3 = inlined_call_operand.vmem [shape: f32[32,64], index: 3, kind: input, shape index: {}]
  %s4 = inlined_call_operand.vmem [shape: f32[1,64], index: 4, kind: input, shape index: {}]
  %s5 = inlined_call_operand.vmem [shape: f32[64,4], index: 5, kind: input, shape index: {}]
  %s6 = inlined_call_operand.vmem [shape: f32[1,4], index: 6, kind: input, shape index: {}]
  %s7 = inlined_call_operand.vmem [shape: f32[16,4], index: 7, kind: output, shape index: {}]
  %s8 = sld [smem:[#allocation0]]
  $region38: #{tpu_custom_call.1} parent=0
    _
  %s10 = ssub.s32 1, %s8
  %s11 = scalar_select 0, %s10, %s8
  // Predicated region
  $region2: #{tpu_custom_call.1} parent=0 // pred_check
    _
  $region3: #{tpu_custom_call.1} parent=0 // pred_check_branch
    %13 = sbr.rel (0) target = $region5
  $region4: #{tpu_custom_call.1} parent=0 // pred_region
    _
  $region5: #{tpu_custom_call.1} parent=0 // pred_fallthru
    _
  // Predicated region
  $region6: #{tpu_custom_call.1} parent=0 // pred_check
    _
  $region7: #{tpu_custom_call.1} parent=0 // pred_check_branch
    %15 = sbr.rel (0) target = $region9
  $region8: #{tpu_custom_call.1} parent=0 // pred_region
    _
  $region9: #{tpu_custom_call.1} parent=0 // pred_fallthru
    _
  // Predicated region
  $region10: #{tpu_custom_call.1} parent=0 // pred_check
    _
  $region11: #{tpu_custom_call.1} parent=0 // pred_check_branch
    %17 = sbr.rel (0) target = $region13
  $region12: #{tpu_custom_call.1} parent=0 // pred_region
    _
  $region13: #{tpu_custom_call.1} parent=0 // pred_fallthru
    _
  // Predicated region
  $region14: #{tpu_custom_call.1} parent=0 // pred_check
    _
  $region15: #{tpu_custom_call.1} parent=0 // pred_check_branch
    %19 = sbr.rel (0) target = $region17
  $region16: #{tpu_custom_call.1} parent=0 // pred_region
    _
  $region17: #{tpu_custom_call.1} parent=0 // pred_fallthru
    _
  // Predicated region
  $region18: #{tpu_custom_call.1} parent=0 // pred_check
    _
  $region19: #{tpu_custom_call.1} parent=0 // pred_check_branch
    %21 = sbr.rel (0) target = $region21
  $region20: #{tpu_custom_call.1} parent=0 // pred_region
    _
  $region21: #{tpu_custom_call.1} parent=0 // pred_fallthru
    _
  // Predicated region
  $region22: #{tpu_custom_call.1} parent=0 // pred_check
    _
  $region23: #{tpu_custom_call.1} parent=0 // pred_check_branch
    %23 = sbr.rel (0) target = $region25
  $region24: #{tpu_custom_call.1} parent=0 // pred_region
    _
  $region25: #{tpu_custom_call.1} parent=0 // pred_fallthru
    _
  // Predicated region
  $region26: #{tpu_custom_call.1} parent=0 // pred_check
    _
  $region27: #{tpu_custom_call.1} parent=0 // pred_check_branch
    %25 = sbr.rel (0) target = $region29
  $region28: #{tpu_custom_call.1} parent=0 // pred_region
    _
  $region29: #{tpu_custom_call.1} parent=0 // pred_fallthru
    _
  %v26 = vld [vmem:[%s0] sm:$0xff]
  %v27 = vld [vmem:[%s0 + $0x8] sm:$0xff]
  %v28 = vld [vmem:[%s1] sm:$0xff]
  %v29 = vld [vmem:[%s2] sm:$0x1]
  %v31 = vperm.slane %v29, 0
  %vm33 = vcmask 64512
  %v35 = vsel %vm33, %v26, 0
  %v38 = vsel %vm33, %v27, 0
  %40 = vmatpush.msra.mxu0 0.0
  %41 = vmatpush.msra.mxu0 0.0
  %42 = vmatpush.msra.mxu0 0.0
  %43 = vmatpush.msra.mxu0 0.0
  %44 = vmatpush.msra.mxu0 0.0
  %45 = vmatpush.msra.mxu0 0.0
  %46 = vmatpush.msra.mxu0 0.0
  %47 = vmatpush.msra.mxu0 0.0
  %48 = vmatpush.msra.mxu0 0.0
  %49 = vmatpush.msra.mxu0 0.0
  %50 = vmatpush.msra.mxu0 0.0
  %51 = vmatpush.msra.mxu0 0.0
  %52 = vmatpush.msra.mxu0 0.0
  %53 = vmatpush.msra.mxu0 0.0
  %54 = vmatpush.msra.mxu0 0.0
  %55 = vmatpush.msra.mxu0 %v28
  %56 = vmatmul.f32.gmra.mxu0 %v35
  %v57 = vpop.f32.mrf.mxu0
  %v58 = vadd.f32 %v31, %v57
  %59 = vmatmul.f32.gmra.mxu0 %v38
  %v60 = vpop.f32.mrf.mxu0
  %v61 = vadd.f32 %v31, %v60
  %62 = vdwg.mxu0
  %v63 = vmax.f32 %v58, 0.0
  %v64 = vmax.f32 %v61, 0.0
  %v65 = vld [vmem:[%s3] sm:$0xff]
  %v66 = vld [vmem:[%s3 + $0x8] sm:$0xff]
  %v67 = vld [vmem:[%s3 + $0x10] sm:$0xff]
  %v68 = vld [vmem:[%s3 + $0x18] sm:$0xff]
  %v69 = vld [vmem:[%s4] sm:$0x1]
  %v71 = vperm.slane %v69, 0
  %vm73 = vcmask 261120
  %v75 = vsel %vm73, %v63, 0
  %v78 = vsel %vm73, %v64, 0
  %80 = vmatpush.msra.mxu0 0.0
  %81 = vmatpush.msra.mxu0 0.0
  %82 = vmatpush.msra.mxu0 0.0
  %83 = vmatpush.msra.mxu0 0.0
  %84 = vmatpush.msra.mxu0 0.0
  %85 = vmatpush.msra.mxu0 0.0
  %86 = vmatpush.msra.mxu0 0.0
  %87 = vmatpush.msra.mxu0 0.0
  %88 = vmatpush.msra.mxu0 0.0
  %89 = vmatpush.msra.mxu0 0.0
  %90 = vmatpush.msra.mxu0 0.0
  %91 = vmatpush.msra.mxu0 0.0
  %92 = vmatpush.msra.mxu0 %v68
  %93 = vmatpush.msra.mxu0 %v67
  %94 = vmatpush.msra.mxu0 %v66
  %95 = vmatpush.msra.mxu0 %v65
  %96 = vmatmul.f32.gmra.mxu0 %v75
  %v97 = vpop.f32.mrf.mxu0
  %v98 = vadd.f32 %v71, %v97
  %99 = vmatmul.f32.gmra.mxu0 %v78
  %v100 = vpop.f32.mrf.mxu0
  %v101 = vadd.f32 %v71, %v100
  %102 = vdwg.mxu0
  %v103 = vmax.f32 %v98, 0.0
  %v104 = vmax.f32 %v101, 0.0
  %v105 = vld [vmem:[%s5] sm:$0xff]
  %v106 = vld [vmem:[%s5 + $0x8] sm:$0xff]
  %v107 = vld [vmem:[%s5 + $0x10] sm:$0xff]
  %v108 = vld [vmem:[%s5 + $0x18] sm:$0xff]
  %v109 = vld [vmem:[%s5 + $0x20] sm:$0xff]
  %v110 = vld [vmem:[%s5 + $0x28] sm:$0xff]
  %v111 = vld [vmem:[%s5 + $0x30] sm:$0xff]
  %v112 = vld [vmem:[%s5 + $0x38] sm:$0xff]
  %v113 = vld [vmem:[%s6] sm:$0x1]
  %v115 = vperm.slane %v113, 0
  %vm117 = vcmask 523264
  %v119 = vsel %vm117, %v103, 0
  %v122 = vsel %vm117, %v104, 0
  %124 = vmatpush.msra.mxu0 0.0
  %125 = vmatpush.msra.mxu0 0.0
  %126 = vmatpush.msra.mxu0 0.0
  %127 = vmatpush.msra.mxu0 0.0
  %128 = vmatpush.msra.mxu0 0.0
  %129 = vmatpush.msra.mxu0 0.0
  %130 = vmatpush.msra.mxu0 0.0
  %131 = vmatpush.msra.mxu0 0.0
  %132 = vmatpush.msra.mxu0 %v112
  %133 = vmatpush.msra.mxu0 %v111
  %134 = vmatpush.msra.mxu0 %v110
  %135 = vmatpush.msra.mxu0 %v109
  %136 = vmatpush.msra.mxu0 %v108
  %137 = vmatpush.msra.mxu0 %v107
  %138 = vmatpush.msra.mxu0 %v106
  %139 = vmatpush.msra.mxu0 %v105
  %140 = vmatmul.f32.gmra.mxu0 %v119
  %v141 = vpop.f32.mrf.mxu0
  %v142 = vadd.f32 %v115, %v141
  %143 = vmatmul.f32.gmra.mxu0 %v122
  %v144 = vpop.f32.mrf.mxu0
  %v145 = vadd.f32 %v115, %v144
  %146 = vdwg.mxu0
  %vm147 = vcmask 31744
  %148 = vst.msk [vmem:[%s7] sm:$0xff] %vm147, %v142
  %149 = vst.msk [vmem:[%s7 + $0x8] sm:$0xff] %vm147, %v145
  // Predicated region
  $region30: #{tpu_custom_call.1} parent=0 // pred_check
    _
  $region31: #{tpu_custom_call.1} parent=0 // pred_check_branch
    %151 = sbr.rel (0) target = $region33
  $region32: #{tpu_custom_call.1} parent=0 // pred_region
    _
  $region33: #{tpu_custom_call.1} parent=0 // pred_fallthru
    _
  // Predicated region
  $region34: #{tpu_custom_call.1} parent=0 // pred_check
    _
  $region35: #{tpu_custom_call.1} parent=0 // pred_check_branch
    %153 = sbr.rel (0) target = $region37
  $region36: #{tpu_custom_call.1} parent=0 // pred_region
    _
  $region37: #{tpu_custom_call.1} parent=0 // pred_fallthru
    _

</llo_original>
